<compile_context>
chip_gen: v7x
topology: tpu7x:2x2x1
jax: 0.10.0
libtpu: 0.0.40
codegen_flags: <defaults>
</compile_context>

<pallas_src>
import functools

import jax
import jax.numpy as jnp
from jax import lax
from jax.experimental import pallas as pl
from jax.experimental.pallas import tpu as pltpu


def _round_up(x, m):
    return ((x + m - 1) // m) * m


def _apply_activation(y, activation):
    # Trace-time (Python) branch — mirrors my_FC.__init__'s activation choice.
    if activation == "relu":
        return jnp.maximum(y, 0.0)
    elif activation == "lrelu":
        return jnp.where(y >= 0.0, y, 0.01 * y)
    elif activation == "selu":
        alpha = 1.6732632423543772848170429916717
        scale = 1.0507009873554804934193349852946
        return scale * jnp.where(y >= 0.0, y, alpha * (jnp.exp(y) - 1.0))
    elif activation == "tanh":
        return jnp.tanh(y)
    elif activation == "sigmoid":
        return jax.nn.sigmoid(y)
    elif activation == "elu":
        return jnp.where(y >= 0.0, y, jnp.exp(y) - 1.0)
    else:
        return y


def _tpu_vmem_capacity():
    """Per-TensorCore VMEM capacity in bytes.  (detected?, bytes)."""
    try:
        return True, int(pltpu.get_tpu_info().vmem_capacity_bytes)
    except Exception:
        # Conservative fallback: assume the smallest per-TC VMEM (v7x, 64 MiB).
        return False, 64 * 1024 * 1024


# --------------------------------------------------------------------------
# Kernels
# --------------------------------------------------------------------------
def _fc_kernel_acc(x_ref, w_ref, b_ref, o_ref, acc_ref, *,
                   activation, cast_x, compute_dtype, precision):
    """Multi-K-step kernel: fp32 VMEM accumulator, init/finalize via pl.when.

    x_ref: (TM, TK); w_ref: (TK, TN) pre-transposed; b_ref: (1, TN)."""
    k = pl.program_id(2)

    @pl.when(k == 0)
    def _():
        acc_ref[...] = jnp.zeros_like(acc_ref)

    x = x_ref[...]
    if cast_x:  # trace-time: cast fp32 x tile to the MXU operand dtype here
        x = x.astype(compute_dtype)
    acc_ref[...] += jnp.dot(x, w_ref[...],
                            preferred_element_type=jnp.float32,
                            precision=precision)

    @pl.when(k == pl.num_programs(2) - 1)
    def _():
        y = acc_ref[...] + b_ref[...]          # bias add in fp32
        o_ref[...] = _apply_activation(y, activation).astype(o_ref.dtype)


def _fc_kernel_single(x_ref, w_ref, b_ref, o_ref, *,
                      activation, cast_x, compute_dtype, precision):
    """Single-K-step kernel: no accumulator scratch, write result directly."""
    x = x_ref[...]
    if cast_x:
        x = x.astype(compute_dtype)
    y = jnp.dot(x, w_ref[...],
                preferred_element_type=jnp.float32,
                precision=precision)
    y = y + b_ref[...]
    o_ref[...] = _apply_activation(y, activation).astype(o_ref.dtype)


# --------------------------------------------------------------------------
# Layer wrapper (one-time weight prep + per-call pallas_call)
# --------------------------------------------------------------------------
class MyFCPallas:
    """Pallas equivalent of my_FC.  Weight prep (pad/cast/transpose) happens
    once at construction; __call__ only pads/casts the activation as needed."""

    def __init__(self, weight, bias, activation="relu", *,
                 compute_dtype=jnp.bfloat16, out_dtype=None,
                 tm=None, tn=None, tk=None):
        out_features, in_features = weight.shape
        self.in_features = int(in_features)
        self.out_features = int(out_features)
        self.activation = activation
        self.compute_dtype = compute_dtype
        self.out_dtype = out_dtype

        detected, vmem_cap = _tpu_vmem_capacity()
        self.vmem_cap = vmem_cap
        # v7x has 64 MiB per TC; v5e/v6e have 128 MiB.
        self.is_small_vmem = vmem_cap < 96 * 1024 * 1024
        self.is_v7x = detected and self.is_small_vmem

        # Generation-aware tile defaults (review: ~12 MiB footprint default;
        # bigger tiles only where VMEM is 128 MiB and the layer is large).
        tm_d, tn_d, tk_d = 512, 1024, 1024
        if (not self.is_small_vmem) and out_features >= 4096 and in_features >= 2048:
            tm_d, tn_d, tk_d = 1024, 2048, 1024
        self.tm_default = int(tm) if tm is not None else tm_d
        tn_d = int(tn) if tn is not None else tn_d
        tk_d = int(tk) if tk is not None else tk_d

        # Clamp N/K tiles to the lane-aligned problem size.
        self.TN = min(tn_d, _round_up(out_features, 128))
        self.TK = min(tk_d, _round_up(in_features, 128))
        self.N_pad = _round_up(out_features, self.TN)
        self.K_pad = _round_up(in_features, self.TK)

        # One-time weight prep: pad -> transpose to (K_pad, N_pad) -> bf16.
        w = weight
        if (self.N_pad, self.K_pad) != (out_features, in_features):
            w = jnp.pad(w, ((0, self.N_pad - out_features),
                            (0, self.K_pad - in_features)))
        self.w_t = jnp.asarray(w.T, dtype=compute_dtype)        # (K_pad, N_pad)

        b = bias
        if self.N_pad != out_features:
            b = jnp.pad(b, (0, self.N_pad - out_features))
        self.b2d = b.reshape(1, self.N_pad).astype(jnp.float32)  # (1, N_pad)

    def __call__(self, x):
        lead_shape = x.shape[:-1]
        x2d = x.reshape(-1, x.shape[-1])
        B, in_features = x2d.shape
        assert in_features == self.in_features, "in_features mismatch"

        out_dtype = self.out_dtype if self.out_dtype is not None else x.dtype
        TN, TK = self.TN, self.TK
        N_pad, K_pad = self.N_pad, self.K_pad
        n_steps = N_pad // TN
        k_steps = K_pad // TK

        # x is re-read n_steps times by the kernel: pre-cast it in the wrapper
        # only when that re-streaming saving outweighs the extra HBM pass.
        needs_cast = (x2d.dtype != self.compute_dtype)
        cast_x_in_wrapper = needs_cast and n_steps > 1
        cast_x_in_kernel = needs_cast and not cast_x_in_wrapper

        x_item = jnp.dtype(self.compute_dtype if cast_x_in_wrapper
                           else x2d.dtype).itemsize
        w_item = jnp.dtype(self.compute_dtype).itemsize
        out_item = jnp.dtype(out_dtype).itemsize

        # Deeper W stream only on v7x (small VMEM, fast HBM).
        w_nbuf = 3 if (self.is_v7x and k_steps > 1) else 2

        def footprint(tm):
            f = 2 * tm * TK * x_item            # double-buffered x tiles
            f += w_nbuf * TK * TN * w_item      # W tiles
            f += 2 * TN * 4                     # bias tiles
            f += 2 * tm * TN * out_item         # output tiles
            if k_steps > 1:
                f += tm * TN * 4                # fp32 accumulator scratch
            return f

        # Pick TM, shrinking only if the footprint would exceed the budget.
        TM = min(self.tm_default, _round_up(B, 8))
        vmem_budget = min(int(self.vmem_cap * 3 // 4), 96 * 1024 * 1024)
        while footprint(TM) > vmem_budget and TM > 8:
            new_tm = max(8, (TM // 2) // 8 * 8)
            if new_tm == TM:
                break
            TM = new_tm
        M_pad = _round_up(B, TM)

        # Pad / cast the activation (per-call; weights were prepped at init).
        x_p = x2d
        if (M_pad, K_pad) != (B, in_features):
            x_p = jnp.pad(x2d, ((0, M_pad - B), (0, K_pad - in_features)))
        if cast_x_in_wrapper:
            x_p = x_p.astype(self.compute_dtype)

        # Explicit scoped-VMEM limit whenever we might exceed v5e's 16 MiB
        # default; never above 75% of physical per-TC VMEM (v7x headroom).
        est_vmem = footprint(TM)
        vmem_limit = None
        if est_vmem > 14 * 1024 * 1024:
            vmem_limit = min(max(int(est_vmem * 1.5), est_vmem + (4 << 20)),
                             int(self.vmem_cap * 3 // 4))

        precision = (lax.Precision.HIGHEST
                     if self.compute_dtype == jnp.float32 else None)

        # Advisory cost estimate with actual re-streamed traffic.
        transcendental = (B * self.out_features
                          if self.activation in ("selu", "tanh", "sigmoid", "elu")
                          else 0)
        bytes_accessed = (M_pad * K_pad * x_item * n_steps          # x re-reads
                          + K_pad * N_pad * w_item * (M_pad // TM)  # W re-reads
                          + N_pad * 4
                          + M_pad * N_pad * out_item)
        cost = pl.CostEstimate(flops=int(2 * M_pad * K_pad * N_pad),
                               transcendentals=int(transcendental),
                               bytes_accessed=int(bytes_accessed))

        if k_steps > 1:
            grid = (M_pad // TM, N_pad // TN, k_steps)
            w_kwargs = {}
            if w_nbuf == 3:
                w_kwargs["pipeline_mode"] = pl.Buffered(3)
            in_specs = [
                pl.BlockSpec((TM, TK), lambda i, j, k: (i, k)),            # x
                pl.BlockSpec((TK, TN), lambda i, j, k: (k, j), **w_kwargs),  # W^T
                pl.BlockSpec((1, TN), lambda i, j, k: (0, j)),             # bias
            ]
            out_spec = pl.BlockSpec((TM, TN), lambda i, j, k: (i, j))
            scratch = [pltpu.VMEM((TM, TN), jnp.float32)]
            dim_sem = ("parallel", "parallel", "arbitrary")
            kernel = functools.partial(
                _fc_kernel_acc, activation=self.activation,
                cast_x=cast_x_in_kernel, compute_dtype=self.compute_dtype,
                precision=precision)
        else:
            grid = (M_pad // TM, N_pad // TN)
            in_specs = [
                pl.BlockSpec((TM, TK), lambda i, j: (i, 0)),
                pl.BlockSpec((TK, TN), lambda i, j: (0, j)),
                pl.BlockSpec((1, TN), lambda i, j: (0, j)),
            ]
            out_spec = pl.BlockSpec((TM, TN), lambda i, j: (i, j))
            scratch = []
            dim_sem = ("parallel", "parallel")
            kernel = functools.partial(
                _fc_kernel_single, activation=self.activation,
                cast_x=cast_x_in_kernel, compute_dtype=self.compute_dtype,
                precision=precision)

        out_padded = pl.pallas_call(
            kernel,
            out_shape=jax.ShapeDtypeStruct((M_pad, N_pad), out_dtype),
            grid_spec=pltpu.PrefetchScalarGridSpec(
                num_scalar_prefetch=0,
                grid=grid,
                in_specs=in_specs,
                out_specs=out_spec,
                scratch_shapes=scratch),
            compiler_params=pltpu.CompilerParams(
                dimension_semantics=dim_sem,
                vmem_limit_bytes=vmem_limit),
            cost_estimate=cost,
        )(x_p, self.w_t, self.b2d)

        out = out_padded[:B, :self.out_features]
        return out.reshape(*lead_shape, self.out_features)


# --------------------------------------------------------------------------
# Self-test
# --------------------------------------------------------------------------
if __name__ == "__main__":
    key = jax.random.PRNGKey(0)

    def make_layer(k, in_f, out_f):
        kw, kb = jax.random.split(k)
        bound = 1.0 / (in_f ** 0.5)
        w = jax.random.uniform(kw, (out_f, in_f), minval=-bound, maxval=bound,
                               dtype=jnp.float32)
        b = jax.random.uniform(kb, (out_f,), minval=-bound, maxval=bound,
                               dtype=jnp.float32)
        return w, b

    def check(out, x, w, b, act_fn):
        ref32 = act_fn(x @ w.T + b)
        ref16 = act_fn(jnp.dot(x.astype(jnp.bfloat16), w.T.astype(jnp.bfloat16),
                               preferred_element_type=jnp.float32) + b)
        assert out.shape == ref32.shape
        # Matches the kernel's bf16-operand / fp32-accumulate math closely ...
        assert jnp.allclose(out, ref16, atol=2e-3, rtol=2e-3)
        # ... and the full-fp32 PyTorch-style reference loosely.
        assert jnp.allclose(out, ref32, atol=5e-2, rtol=5e-2)

    k1, k2, k3, kx1, kx2, kx3 = jax.random.split(key, 6)

    # 1) Tiny layer: single-K path (no scratch), x cast inside the kernel.
    w1, b1 = make_layer(k1, 32, 64)
    x1 = jax.random.normal(kx1, (8, 32), dtype=jnp.float32)
    fc1 = MyFCPallas(w1, b1, activation="relu")
    o1 = jax.block_until_ready(fc1(x1))
    check(o1, x1, w1, b1, lambda y: jnp.maximum(y, 0.0))

    # 2) Multi-K path (fp32 accumulator scratch), forced small tk; tanh.
    w2, b2 = make_layer(k2, 256, 64)
    x2 = jax.random.normal(kx2, (16, 256), dtype=jnp.float32)
    fc2 = MyFCPallas(w2, b2, activation="tanh", tk=128)
    o2 = jax.block_until_ready(fc2(x2))
    check(o2, x2, w2, b2, jnp.tanh)

    # 3) Multi-N path (x pre-cast once in the wrapper), forced small tn; sigmoid.
    w3, b3 = make_layer(k3, 64, 256)
    x3 = jax.random.normal(kx3, (8, 64), dtype=jnp.float32)
    fc3 = MyFCPallas(w3, b3, activation="sigmoid", tn=128)
    o3 = jax.block_until_ready(fc3(x3))
    check(o3, x3, w3, b3, jax.nn.sigmoid)

    print("KERNEL_OK")
</pallas_src>

<mosaic_0001>
module attributes {stable_mosaic.version = 11 : i64} {
  func.func @_fc_kernel_single(%arg0: i32, %arg1: i32, %arg2: memref<8x128xf32, #tpu.memory_space<vmem>>, %arg3: memref<128x128xbf16, #tpu.memory_space<vmem>>, %arg4: memref<1x128xf32, #tpu.memory_space<vmem>>, %arg5: memref<8x128xf32, #tpu.memory_space<vmem>>) attributes {dimension_semantics = [#tpu.dimension_semantics<parallel>, #tpu.dimension_semantics<parallel>], iteration_bounds = array<i64: 1, 1>, scalar_prefetch = 0 : i64, scratch_operands = 0 : i64, tpu.core_type = #tpu.core_type<tc>, window_params = [{transform_indices = @transform_0, window_bounds = array<i64: 8, 128>}, {transform_indices = @transform_1, window_bounds = array<i64: 128, 128>}, {transform_indices = @transform_2, window_bounds = array<i64: 1, 128>}, {transform_indices = @transform_3, window_bounds = array<i64: 8, 128>}]} {
    %c0 = arith.constant 0 : index
    %c0_0 = arith.constant 0 : index
    %0 = vector.load %arg2[%c0, %c0_0] : memref<8x128xf32, #tpu.memory_space<vmem>>, vector<8x128xf32>
    %1 = arith.truncf %0 : vector<8x128xf32> to vector<8x128xbf16>
    %c0_1 = arith.constant 0 : index
    %c0_2 = arith.constant 0 : index
    %2 = vector.load %arg3[%c0_1, %c0_2] : memref<128x128xbf16, #tpu.memory_space<vmem>>, vector<128x128xbf16>
    %cst = arith.constant dense<0.000000e+00> : vector<8x128xf32>
    %3 = tpu.matmul %1, %2, %cst {dimension_numbers = #tpu.dot_dimension_numbers<[1], [0], [0], [1], [0, 0, 1, 1], [], []>} : vector<8x128xbf16>, vector<128x128xbf16>, vector<8x128xf32> -> vector<8x128xf32>
    %c0_3 = arith.constant 0 : index
    %c0_4 = arith.constant 0 : index
    %4 = vector.load %arg4[%c0_3, %c0_4] : memref<1x128xf32, #tpu.memory_space<vmem>>, vector<1x128xf32>
    %5 = vector.broadcast %4 : vector<1x128xf32> to vector<8x128xf32>
    %6 = arith.addf %3, %5 : vector<8x128xf32>
    %cst_5 = arith.constant 0.000000e+00 : f32
    %7 = vector.broadcast %cst_5 : f32 to vector<8x128xf32>
    %8 = arith.maximumf %6, %7 : vector<8x128xf32>
    %c0_6 = arith.constant 0 : index
    %c0_7 = arith.constant 0 : index
    %9 = vector.load %arg5[%c0_6, %c0_7] : memref<8x128xf32, #tpu.memory_space<vmem>>, vector<8x128xf32>
    tpu.vector_store %arg5[%c0_6, %c0_7], %8 {strides = array<i32>} : memref<8x128xf32, #tpu.memory_space<vmem>>, vector<8x128xf32>,
    return
  }
  func.func @transform_0(%arg0: i32, %arg1: i32) -> (i32, i32) {
    %c0_i32 = arith.constant 0 : i32
    %c0_i32_0 = arith.constant 0 : i32
    return %arg0, %c0_i32 : i32, i32
  }
  func.func @transform_1(%arg0: i32, %arg1: i32) -> (i32, i32) {
    %c0_i32 = arith.constant 0 : i32
    %c0_i32_0 = arith.constant 0 : i32
    return %c0_i32, %arg1 : i32, i32
  }
  func.func @transform_2(%arg0: i32, %arg1: i32) -> (i32, i32) {
    %c0_i32 = arith.constant 0 : i32
    %c0_i32_0 = arith.constant 0 : i32
    return %c0_i32, %arg1 : i32, i32
  }
  func.func @transform_3(%arg0: i32, %arg1: i32) -> (i32, i32) {
    %c0_i32 = arith.constant 0 : i32
    return %arg0, %arg1 : i32, i32
  }
}

</mosaic_0001>

<llo_original>
// kernel: tpu_custom_call.1
$region0: #{tpu_custom_call.1}
  #allocation0 [shape = 'u32[]', space=smem, size = 0x4, offset = 0x4, fixed_abs, tag = 'smem constant byte address 0x4 - core index']
  #allocation1 [shape = 'u32[144,128]{1,0:T(1,128)}', space=vmem, size = 0x12000, scoped, tag = 'internal scratch']
  %s0 = inlined_call_operand.hbm [shape: f32[8,128], index: 0, kind: input, shape index: {}]
  %s1 = inlined_call_operand.hbm [shape: bf16[128,128], index: 1, kind: input, shape index: {}]
  %s2 = inlined_call_operand.vmem [shape: f32[1,128], index: 2, kind: input, shape index: {}]
  %s3 = inlined_call_operand.hbm [shape: f32[8,128], index: 3, kind: output, shape index: {}]
  %s4 = sld [smem:[#allocation0]]
  $region30: #{tpu_custom_call.1} parent=0
    _
  %s6 = ssub.s32 1, %s4
  %s7 = scalar_select 0, %s6, %s4
  $region1: #{tpu_custom_call.1} parent=0
    #allocation2 [shape = 'u8[4096]{0}', space=vmem, size = 0x1000, scoped, tag = 'input window, operand 0, single buffered']
    #allocation3 [shape = 's32[1]{0}', space=sflag, size = 0x4, scoped, tag = 'scoped memory for tpu_custom_call.1']
    #allocation4 [shape = 's32[1]{0}', space=sflag, size = 0x4, scoped, tag = 'scoped memory for tpu_custom_call.1']
    #allocation5 [shape = 'u8[32768]{0}', space=vmem, size = 0x8000, scoped, tag = 'input window, operand 1, single buffered']
    #allocation6 [shape = 's32[1]{0}', space=sflag, size = 0x4, scoped, tag = 'scoped memory for tpu_custom_call.1']
    #allocation7 [shape = 'u8[4096]{0}', space=vmem, size = 0x1000, scoped, tag = 'output window, operand 0, single buffered']
    %8 = vsyncpa [#allocation3], 0
    %9 = vsyncpa [#allocation6], 0
    %10 = vsyncpa [#allocation4], 0
    // Predicated region
    $region2: #{tpu_custom_call.1} parent=1 // pred_check
      _
    $region3: #{tpu_custom_call.1} parent=1 // pred_check_branch
      %12 = sbr.rel (0) target = $region5
    $region4: #{tpu_custom_call.1} parent=1 // pred_region
      %s14 = ssub.s32 128, 128
      %15 = vsyncadd [#allocation3], %s14
      %s17 = sshll.u32 [#allocation2], 4
      %s18 = int_to_ptr.vmem [resolvable:$true] %s17
      %20 = dma.hbm_to_vmem [thread:$0]  %s0, 128, %s18, [#allocation3]
    $region5: #{tpu_custom_call.1} parent=1 // pred_fallthru
      _
    // Predicated region
    $region6: #{tpu_custom_call.1} parent=1 // pred_check
      _
    $region7: #{tpu_custom_call.1} parent=1 // pred_check_branch
      %22 = sbr.rel (0) target = $region9
    $region8: #{tpu_custom_call.1} parent=1 // pred_region
      %s24 = ssub.s32 1024, 1024
      %25 = vsyncadd [#allocation6], %s24
      %s26 = sshll.u32 [#allocation5], 4
      %s27 = int_to_ptr.vmem [resolvable:$true] %s26
      %32 = dma.hbm_to_vmem [thread:$0]  %s1, 1024, %s27, [#allocation6], 64, 64, 4
    $region9: #{tpu_custom_call.1} parent=1 // pred_fallthru
      _
    // Predicated region
    $region10: #{tpu_custom_call.1} parent=1 // pred_check
      _
    $region11: #{tpu_custom_call.1} parent=1 // pred_check_branch
      %34 = sbr.rel (0) target = $region13
    $region12: #{tpu_custom_call.1} parent=1 // pred_region
      _
    $region13: #{tpu_custom_call.1} parent=1 // pred_fallthru
      _
    // Predicated region
    $region14: #{tpu_custom_call.1} parent=1 // pred_check
      _
    $region15: #{tpu_custom_call.1} parent=1 // pred_check_branch
      %36 = sbr.rel (0) target = $region17
    $region16: #{tpu_custom_call.1} parent=1 // pred_region
      %37 = dma.done [#allocation3], 128
    $region17: #{tpu_custom_call.1} parent=1 // pred_fallthru
      _
    // Predicated region
    $region18: #{tpu_custom_call.1} parent=1 // pred_check
      _
    $region19: #{tpu_custom_call.1} parent=1 // pred_check_branch
      %39 = sbr.rel (0) target = $region21
    $region20: #{tpu_custom_call.1} parent=1 // pred_region
      %40 = dma.done [#allocation6], 1024
    $region21: #{tpu_custom_call.1} parent=1 // pred_fallthru
      _
    %v42 = vld [vmem:[#allocation2] sm:$0xff]
    %v43 = vpack.c.bf16 %v42, %v42
    %v44 = vld [vmem:[#allocation5] sm:$0xf]
    %v45 = vld [vmem:[#allocation5 + $0x4] sm:$0xf]
    %v46 = vld [vmem:[#allocation5 + $0x8] sm:$0xf]
    %v47 = vld [vmem:[#allocation5 + $0xc] sm:$0xf]
    %v48 = vld [vmem:[#allocation5 + $0x10] sm:$0xf]
    %v49 = vld [vmem:[#allocation5 + $0x14] sm:$0xf]
    %v50 = vld [vmem:[#allocation5 + $0x18] sm:$0xf]
    %v51 = vld [vmem:[#allocation5 + $0x1c] sm:$0xf]
    %v52 = vld [vmem:[#allocation5 + $0x20] sm:$0xf]
    %v53 = vld [vmem:[#allocation5 + $0x24] sm:$0xf]
    %v54 = vld [vmem:[#allocation5 + $0x28] sm:$0xf]
    %v55 = vld [vmem:[#allocation5 + $0x2c] sm:$0xf]
    %v56 = vld [vmem:[#allocation5 + $0x30] sm:$0xf]
    %v57 = vld [vmem:[#allocation5 + $0x34] sm:$0xf]
    %v58 = vld [vmem:[#allocation5 + $0x38] sm:$0xf]
    %v59 = vld [vmem:[#allocation5 + $0x3c] sm:$0xf]
    %v60 = vld [vmem:[%s2] sm:$0x1]
    %v62 = vlaneseq
    %v63 = vshrl.u32 %v62, 7
    %v64 = vsub.s32 0, %v63
    %v65 = vrot.slane %v60, %v64
    %v83 = vunpack.c.l.b16 %v44
    %v84 = vunpack.c.l.b16 %v45
    %v85 = vunpack.c.l.b16 %v46
    %v86 = vunpack.c.l.b16 %v47
    %v87 = vunpack.c.l.b16 %v48
    %v88 = vunpack.c.l.b16 %v49
    %v89 = vunpack.c.l.b16 %v50
    %v90 = vunpack.c.l.b16 %v51
    %v91 = vunpack.c.l.b16 %v52
    %v92 = vunpack.c.l.b16 %v53
    %v93 = vunpack.c.l.b16 %v54
    %v94 = vunpack.c.l.b16 %v55
    %v95 = vunpack.c.l.b16 %v56
    %v96 = vunpack.c.l.b16 %v57
    %v97 = vunpack.c.l.b16 %v58
    %v98 = vunpack.c.l.b16 %v59
    %v99 = vpack.c.b16 %v84, %v83
    %v100 = vpack.c.b16 %v86, %v85
    %v101 = vpack.c.b16 %v88, %v87
    %v102 = vpack.c.b16 %v90, %v89
    %v103 = vpack.c.b16 %v92, %v91
    %v104 = vpack.c.b16 %v94, %v93
    %v105 = vpack.c.b16 %v96, %v95
    %v106 = vpack.c.b16 %v98, %v97
    %115 = vmatprep.subr.bf16.mxu0 0
    %116 = vmatpush1.bf16.msra.mxu0 %v99
    %117 = vmatprep.subr.bf16.mxu0 0
    %118 = vmatpush1.bf16.msra.mxu0 %v100
    %119 = vmatprep.subr.bf16.mxu0 0
    %120 = vmatpush1.bf16.msra.mxu0 %v101
    %121 = vmatprep.subr.bf16.mxu0 0
    %122 = vmatpush1.bf16.msra.mxu0 %v102
    %123 = vmatprep.subr.bf16.mxu0 0
    %124 = vmatpush1.bf16.msra.mxu0 %v103
    %125 = vmatprep.subr.bf16.mxu0 0
    %126 = vmatpush1.bf16.msra.mxu0 %v104
    %127 = vmatprep.subr.bf16.mxu0 0
    %128 = vmatpush1.bf16.msra.mxu0 %v105
    %129 = vmatprep.subr.bf16.mxu0 0
    %130 = vmatpush1.bf16.msra.mxu0 %v106
    %131 = vmatprep.subr.bf16.mxu0 0
    %132 = vmatpush1.bf16.msra.mxu0 0
    %133 = vmatprep.subr.bf16.mxu0 0
    %134 = vmatpush1.bf16.msra.mxu0 0
    %135 = vmatprep.subr.bf16.mxu0 0
    %136 = vmatpush1.bf16.msra.mxu0 0
    %137 = vmatprep.subr.bf16.mxu0 0
    %138 = vmatpush1.bf16.msra.mxu0 0
    %139 = vmatprep.subr.bf16.mxu0 0
    %140 = vmatpush1.bf16.msra.mxu0 0
    %141 = vmatprep.subr.bf16.mxu0 0
    %142 = vmatpush1.bf16.msra.mxu0 0
    %143 = vmatprep.subr.bf16.mxu0 0
    %144 = vmatpush1.bf16.msra.mxu0 0
    %145 = vmatprep.subr.bf16.mxu0 0
    %146 = vmatpush1.bf16.msra.mxu0 0
    %147 = vmatprep.mubr.bf16.mxu0 0
    %148 = vmatmul.mubr.bf16.gmra.mrb[0].mxu0 %v43
    %v149 = vpop.f32.mrb[0].mxu0
    %v150 = vadd.f32 %v65, %v149
    %v151 = vpop.f32.mrb[0].mxu0
    %v152 = vpop.f32.mrb[0].mxu0
    %v153 = vpop.f32.mrb[0].mxu0
    %154 = vdwg.mxu0
    %v155 = vmax.f32 %v150, 0.0
    %156 = vst [vmem:[#allocation7] sm:$0xff] %v155
    // Predicated region
    $region22: #{tpu_custom_call.1} parent=1 // pred_check
      _
    $region23: #{tpu_custom_call.1} parent=1 // pred_check_branch
      %158 = sbr.rel (0) target = $region25
    $region24: #{tpu_custom_call.1} parent=1 // pred_region
      %s160 = ssub.s32 128, 128
      %161 = vsyncadd [#allocation4], %s160
      %s163 = sshll.u32 [#allocation7], 4
      %s164 = int_to_ptr.vmem [resolvable:$true] %s163
      %166 = dma.vmem_to_hbm [thread:$0]  %s164, 128, %s3, [#allocation4]
    $region25: #{tpu_custom_call.1} parent=1 // pred_fallthru
      _
    // Predicated region
    $region26: #{tpu_custom_call.1} parent=1 // pred_check
      _
    $region27: #{tpu_custom_call.1} parent=1 // pred_check_branch
      %168 = sbr.rel (0) target = $region29
    $region28: #{tpu_custom_call.1} parent=1 // pred_region
      %169 = dma.done [#allocation4], 128
    $region29: #{tpu_custom_call.1} parent=1 // pred_fallthru
      _
    %170 = vsyncpa [#allocation3], 1
    %171 = vsyncpa [#allocation6], 1
    %172 = vsyncpa [#allocation4], 1

</llo_original>
